<compile_context>
chip_gen: v7x
topology: tpu7x:2x2x1
jax: 0.10.0
libtpu: 0.0.40
codegen_flags: <defaults>
</compile_context>

<pallas_src>
import functools

import jax
import jax.numpy as jnp
from jax.experimental import pallas as pl
from jax.experimental.pallas import tpu as pltpu


def _round_up(x: int, m: int) -> int:
    return (x + m - 1) // m * m


# --------------------------------------------------------------------------
# Kernel A: support = features @ W  (optionally tanh), emitted in bf16.
# --------------------------------------------------------------------------
def _support_kernel(feat_ref, w_ref, sup_ref, *, active: bool):
    s = jnp.dot(feat_ref[...], w_ref[...], preferred_element_type=jnp.float32)
    if active:  # static Python bool -> two compiled variants; tanh runs on EUP
        s = jnp.tanh(s)
    sup_ref[...] = s.astype(sup_ref.dtype)


# --------------------------------------------------------------------------
# Kernel B: output = adj @ support, tiled (i, j, k) matmul with f32 scratch.
# --------------------------------------------------------------------------
def _aggregate_kernel(adj_ref, sup_ref, out_ref, acc_ref):
    k = pl.program_id(2)

    @pl.when(k == 0)
    def _init():
        acc_ref[...] = jnp.zeros_like(acc_ref)

    acc_ref[...] += jnp.dot(
        adj_ref[...], sup_ref[...], preferred_element_type=jnp.float32
    )

    @pl.when(k == pl.num_programs(2) - 1)
    def _store():
        out_ref[...] = acc_ref[...].astype(out_ref.dtype)


def gnn_layer(
    features,
    weight,
    adj,
    active: bool = False,
    *,
    compute_dtype=jnp.bfloat16,
    tm: int | None = None,
    tk: int | None = None,
    tn: int | None = None,
):
    """Pallas equivalent of GNNLayer.forward(features, adj, active).

    features: [N, F_in], weight: [F_in, F_out], adj: [N, N] (dense).
    Returns [N, F_out] in features.dtype.
    """
    n, f_in = features.shape
    f_in_w, f_out = weight.shape
    assert f_in_w == f_in and adj.shape == (n, n)
    out_dtype = features.dtype

    # ---- lane-dense output: pad F_out up to a multiple of 128 -------------
    f_out_pad = _round_up(f_out, 128)
    if tn is None:
        tn = 128
    assert f_out_pad % tn == 0

    # ---- tile the N dimension (256/512 feed the wide MXUs and amortize the
    #      ~0.35us per-step overhead; also fine on v5e) ----------------------
    n_ru = _round_up(n, 128)
    if tm is None:
        tm = min(512, n_ru)
    if tk is None:
        tk = min(512, n_ru)
    # tm/tk are 128 * power-of-two-ish; max is a multiple of min here.
    n_pad = _round_up(n, max(tm, tk))
    assert n_pad % tm == 0 and n_pad % tk == 0

    # ---- host-side zero padding + bf16 cast (exact for this computation) --
    feat_p = jnp.pad(features.astype(compute_dtype), ((0, n_pad - n), (0, 0)))
    w_p = jnp.pad(weight.astype(compute_dtype), ((0, 0), (0, f_out_pad - f_out)))
    adj_p = jnp.pad(adj.astype(compute_dtype), ((0, n_pad - n), (0, n_pad - n)))
    # TODO(synk): torch.spmm with a truly sparse adjacency would need a
    # CSR/gather spmm kernel; here adj is treated as dense.

    # ---------------- call 1: support = features @ W (+ tanh) --------------
    sup_bytes = (
        feat_p.size * feat_p.dtype.itemsize
        + w_p.size * w_p.dtype.itemsize
        + n_pad * f_out_pad * jnp.dtype(compute_dtype).itemsize
    )
    support_p = pl.pallas_call(
        functools.partial(_support_kernel, active=active),
        out_shape=jax.ShapeDtypeStruct((n_pad, f_out_pad), compute_dtype),
        grid_spec=pltpu.PrefetchScalarGridSpec(
            num_scalar_prefetch=0,
            grid=(n_pad // tm,),
            in_specs=[
                # features: row tile, full F_in (full-dim block is legal)
                pl.BlockSpec((tm, f_in), lambda i: (i, 0)),
                # weight: constant over the grid -> fetched once, resident
                pl.BlockSpec((f_in, f_out_pad), lambda i: (0, 0)),
            ],
            out_specs=pl.BlockSpec((tm, f_out_pad), lambda i: (i, 0)),
        ),
        compiler_params=pltpu.CompilerParams(
            dimension_semantics=("parallel",),
        ),
        cost_estimate=pl.CostEstimate(
            flops=int(2 * n_pad * f_in * f_out_pad),
            transcendentals=int(n_pad * f_out_pad) if active else 0,
            bytes_accessed=int(sup_bytes),
        ),
    )(feat_p, w_p)

    # ---------------- call 2: output = adj @ support ------------------------
    agg_bytes = (
        adj_p.size * adj_p.dtype.itemsize
        + n_pad * f_out_pad * jnp.dtype(compute_dtype).itemsize
        + n_pad * f_out_pad * jnp.dtype(out_dtype).itemsize
    )
    out_p = pl.pallas_call(
        _aggregate_kernel,
        out_shape=jax.ShapeDtypeStruct((n_pad, f_out_pad), out_dtype),
        grid_spec=pltpu.PrefetchScalarGridSpec(
            num_scalar_prefetch=0,
            grid=(n_pad // tm, f_out_pad // tn, n_pad // tk),
            in_specs=[
                # adj: (i, k) tile -- the dominant HBM stream
                pl.BlockSpec((tm, tk), lambda i, j, k: (i, k)),
                # support: (k, j) tile
                pl.BlockSpec((tk, tn), lambda i, j, k: (k, j)),
            ],
            out_specs=pl.BlockSpec((tm, tn), lambda i, j, k: (i, j)),
            scratch_shapes=[pltpu.VMEM((tm, tn), jnp.float32)],
        ),
        compiler_params=pltpu.CompilerParams(
            dimension_semantics=("parallel", "parallel", "arbitrary"),
        ),
        cost_estimate=pl.CostEstimate(
            flops=int(2 * n_pad * n_pad * f_out_pad),
            transcendentals=0,
            bytes_accessed=int(agg_bytes),
        ),
    )(adj_p, support_p)

    return out_p[:n, :f_out]


def xavier_uniform(key, in_features, out_features, dtype=jnp.float32):
    """Xavier/Glorot uniform init (matches torch.nn.init.xavier_uniform_)."""
    bound = jnp.sqrt(6.0 / (in_features + out_features))
    return jax.random.uniform(
        key, (in_features, out_features), dtype=dtype, minval=-bound, maxval=bound
    )


if __name__ == "__main__":
    # Small synthetic graph: N nodes, dense adjacency.
    N, F_IN, F_OUT = 256, 64, 32

    key = jax.random.PRNGKey(0)
    k_feat, k_adj, k_w = jax.random.split(key, 3)

    features = jax.random.normal(k_feat, (N, F_IN), dtype=jnp.float32)
    a = jax.random.uniform(k_adj, (N, N), dtype=jnp.float32)
    adj = (a + a.T) * 0.5 / N  # symmetric, roughly row-normalized
    weight = xavier_uniform(k_w, F_IN, F_OUT)

    # Reference uses the same bf16-quantized inputs (f32 math) that the kernel
    # feeds to the MXU, so tolerances stay tight.
    hp = jax.lax.Precision.HIGHEST
    fb = features.astype(jnp.bfloat16).astype(jnp.float32)
    ab = adj.astype(jnp.bfloat16).astype(jnp.float32)
    wb = weight.astype(jnp.bfloat16).astype(jnp.float32)
    sb = jnp.dot(fb, wb, precision=hp).astype(jnp.bfloat16).astype(jnp.float32)
    sb_act = (
        jnp.tanh(jnp.dot(fb, wb, precision=hp))
        .astype(jnp.bfloat16)
        .astype(jnp.float32)
    )

    # active=False; force small tiles to exercise the i-parallel and
    # k-reduction axes (aggregate grid = (2, 1, 2)).
    out = gnn_layer(features, weight, adj, active=False, tm=128, tk=128)
    out = jax.block_until_ready(out)
    ref = jnp.dot(ab, sb, precision=hp)
    assert out.shape == (N, F_OUT)
    assert jnp.allclose(out, ref, atol=2e-2, rtol=2e-2), float(
        jnp.max(jnp.abs(out - ref))
    )

    # active=True with auto tile selection (tanh applied to the support).
    out_act = gnn_layer(features, weight, adj, active=True)
    out_act = jax.block_until_ready(out_act)
    ref_act = jnp.dot(ab, sb_act, precision=hp)
    assert out_act.shape == (N, F_OUT)
    assert jnp.allclose(out_act, ref_act, atol=2e-2, rtol=2e-2), float(
        jnp.max(jnp.abs(out_act - ref_act))
    )

    print("KERNEL_OK")
</pallas_src>

<mosaic_0001>
module attributes {stable_mosaic.version = 11 : i64} {
  func.func @_support_kernel(%arg0: i32, %arg1: memref<128x64xbf16, #tpu.memory_space<vmem>>, %arg2: memref<64x128xbf16, #tpu.memory_space<vmem>>, %arg3: memref<128x128xbf16, #tpu.memory_space<vmem>>) attributes {dimension_semantics = [#tpu.dimension_semantics<parallel>], iteration_bounds = array<i64: 2>, scalar_prefetch = 0 : i64, scratch_operands = 0 : i64, tpu.core_type = #tpu.core_type<tc>, window_params = [{transform_indices = @transform_0, window_bounds = array<i64: 128, 64>}, {pipeline_mode = #tpu.pipeline_mode<synchronous>, transform_indices = @transform_1, window_bounds = array<i64: 64, 128>}, {transform_indices = @transform_2, window_bounds = array<i64: 128, 128>}]} {
    %c0 = arith.constant 0 : index
    %c0_0 = arith.constant 0 : index
    %0 = vector.load %arg1[%c0, %c0_0] : memref<128x64xbf16, #tpu.memory_space<vmem>>, vector<128x64xbf16>
    %c0_1 = arith.constant 0 : index
    %c0_2 = arith.constant 0 : index
    %1 = vector.load %arg2[%c0_1, %c0_2] : memref<64x128xbf16, #tpu.memory_space<vmem>>, vector<64x128xbf16>
    %cst = arith.constant dense<0.000000e+00> : vector<128x128xf32>
    %2 = tpu.matmul %0, %1, %cst {dimension_numbers = #tpu.dot_dimension_numbers<[1], [0], [0], [1], [0, 0, 1, 1], [], []>} : vector<128x64xbf16>, vector<64x128xbf16>, vector<128x128xf32> -> vector<128x128xf32>
    %3 = arith.truncf %2 : vector<128x128xf32> to vector<128x128xbf16>
    %c0_3 = arith.constant 0 : index
    %c0_4 = arith.constant 0 : index
    %4 = vector.load %arg3[%c0_3, %c0_4] : memref<128x128xbf16, #tpu.memory_space<vmem>>, vector<128x128xbf16>
    tpu.vector_store %arg3[%c0_3, %c0_4], %3 {strides = array<i32>} : memref<128x128xbf16, #tpu.memory_space<vmem>>, vector<128x128xbf16>,
    return
  }
  func.func @transform_0(%arg0: i32) -> (i32, i32) {
    %c0_i32 = arith.constant 0 : i32
    %c0_i32_0 = arith.constant 0 : i32
    return %arg0, %c0_i32 : i32, i32
  }
  func.func @transform_1(%arg0: i32) -> (i32, i32) {
    %c0_i32 = arith.constant 0 : i32
    %c0_i32_0 = arith.constant 0 : i32
    %c0_i32_1 = arith.constant 0 : i32
    return %c0_i32, %c0_i32_0 : i32, i32
  }
  func.func @transform_2(%arg0: i32) -> (i32, i32) {
    %c0_i32 = arith.constant 0 : i32
    %c0_i32_0 = arith.constant 0 : i32
    return %arg0, %c0_i32 : i32, i32
  }
}

</mosaic_0001>

<llo_original>
// kernel: tpu_custom_call.1
$region0: #{tpu_custom_call.1}
  #allocation0 [shape = 'u32[]', space=smem, size = 0x4, offset = 0x4, fixed_abs, tag = 'smem constant byte address 0x4 - core index']
  #allocation1 [shape = 'u32[144,128]{1,0:T(1,128)}', space=vmem, size = 0x12000, scoped, tag = 'internal scratch']
  %s0 = inlined_call_operand.vmem [shape: bf16[256,64], index: 0, kind: input, shape index: {}]
  %s1 = inlined_call_operand.vmem [shape: bf16[64,128], index: 1, kind: input, shape index: {}]
  %s2 = inlined_call_operand.hbm [shape: bf16[256,128], index: 2, kind: output, shape index: {}]
  %s3 = sld [smem:[#allocation0]]
  $region41: #{tpu_custom_call.1} parent=0
    _
  %s5 = ssub.s32 1, %s3
  %s6 = scalar_select 0, %s5, %s3
  $region1: #{tpu_custom_call.1} parent=0
    #allocation2 [shape = 'u8[65536]{0}', space=vmem, size = 0x10000, scoped, tag = 'output window, operand 0']
    #allocation3 [shape = 's32[2]{0}', space=sflag, size = 0x8, scoped, tag = 'scoped memory for tpu_custom_call.1']
    %7 = vsyncpa [#allocation3], 0
    %s8 = scalar_lea.sflag [#allocation3], 1
    %9 = vsyncpa %s8, 0
    loop: start=0, step=1, limit=4
    $region2: #{tpu_custom_call.1} parent=1 // loop_pre_header
      _
    $region3: #{tpu_custom_call.1} parent=1 // loop_header
      %s11 = sphi 0, %s15
      %p12 = scmp.ge.s32.totalorder %s11, 4
      %s21 = sphi 0, %s23
      %s24 = sphi 0, %s21
      %s25 = sphi 0, %s24
      %s41 = sphi 0, %s25
      %s45 = sphi 0, %s45
      %s47 = sphi 0, %s45
      %s48 = sphi 0, %s47
      %s62 = sphi 0, %s48
      %s68 = sphi 0, %s70
      %s71 = sphi 0, %s68
      %s72 = sphi 0, %s71
      %s88 = sphi 0, %s72
    $region4: #{tpu_custom_call.1} parent=1 // loop_header_branch
      %14 = sbr.rel (%p12) target = $region8
    $region5: #{tpu_custom_call.1} parent=1 // loop_body
      %s16 = ssub.s32 %s11, 1
      %s17 = ssub.s32 %s11, 2
      %s18 = sadd.s32 %s11, 1
      %s19 = ssub.s32 %s11, %s18
      %p20 = scmp.eq.s32.totalorder %s19, 0
      %s22 = sadd.s32 %s21, 1
      %s23 = scalar_select %p20, %s21, %s22
      %p26 = pneg %p20
      %p27 = scmp.eq.s32.totalorder %s11, 1
      %p28 = por %p26, %p27
      %p29 = scmp.ne.s32.totalorder %s21, %s24
      %p30 = scmp.eq.s32.totalorder %s11, 0
      %p31 = por %p29, %p30
      %p32 = scmp.ne.s32.totalorder %s21, %s24
      %p33 = scmp.eq.s32.totalorder %s16, 1
      %p34 = por %p32, %p33
      %p35 = scmp.ne.s32.totalorder %s24, %s25
      %p36 = scmp.eq.s32.totalorder %s16, 0
      %p37 = por %p35, %p36
      %p38 = scmp.ne.s32.totalorder %s24, %s25
      %p39 = scmp.eq.s32.totalorder %s17, 1
      %p40 = por %p38, %p39
      %p42 = scmp.ne.s32.totalorder %s25, %s41
      %p43 = scmp.eq.s32.totalorder %s17, 0
      %p44 = por %p42, %p43
      %s46 = sadd.s32 %s45, 1
      %p49 = scmp.eq.s32.totalorder %s11, 1
      %p50 = scmp.ne.s32.totalorder %s45, %s47
      %p51 = scmp.eq.s32.totalorder %s11, 0
      %p52 = por %p50, %p51
      %p53 = scmp.ne.s32.totalorder %s45, %s47
      %p54 = scmp.eq.s32.totalorder %s16, 1
      %p55 = por %p53, %p54
      %p56 = scmp.ne.s32.totalorder %s47, %s48
      %p57 = scmp.eq.s32.totalorder %s16, 0
      %p58 = por %p56, %p57
      %p59 = scmp.ne.s32.totalorder %s47, %s48
      %p60 = scmp.eq.s32.totalorder %s17, 1
      %p61 = por %p59, %p60
      %p63 = scmp.ne.s32.totalorder %s48, %s62
      %p64 = scmp.eq.s32.totalorder %s17, 0
      %p65 = por %p63, %p64
      %s66 = ssub.s32 %s11, %s18
      %p67 = scmp.eq.s32.totalorder %s66, 0
      %s69 = sadd.s32 %s68, 1
      %s70 = scalar_select %p67, %s68, %s69
      %p73 = pneg %p67
      %p74 = scmp.eq.s32.totalorder %s11, 1
      %p75 = por %p73, %p74
      %p76 = scmp.ne.s32.totalorder %s68, %s71
      %p77 = scmp.eq.s32.totalorder %s11, 0
      %p78 = por %p76, %p77
      %p79 = scmp.ne.s32.totalorder %s68, %s71
      %p80 = scmp.eq.s32.totalorder %s16, 1
      %p81 = por %p79, %p80
      %p82 = scmp.ne.s32.totalorder %s71, %s72
      %p83 = scmp.eq.s32.totalorder %s16, 0
      %p84 = por %p82, %p83
      %p85 = scmp.ne.s32.totalorder %s71, %s72
      %p86 = scmp.eq.s32.totalorder %s17, 1
      %p87 = por %p85, %p86
      %p89 = scmp.ne.s32.totalorder %s72, %s88
      %p90 = scmp.eq.s32.totalorder %s17, 0
      %p91 = por %p89, %p90
      %p92 = scmp.le.s32.totalorder 1, %s11
      %p93 = scmp.lt.s32.totalorder %s11, 3
      %p94 = pnand %p92, %p93
      %p95 = pneg %p94
      // Predicated region
      $region9: #{tpu_custom_call.1} parent=5 // pred_check
        _
      $region10: #{tpu_custom_call.1} parent=5 // pred_check_branch
        %97 = sbr.rel (%p94) target = $region12
      $region11: #{tpu_custom_call.1} parent=5 // pred_region
        %s98 = ssub.s32 %s11, 1
        // Predicated region
        $region13: #{tpu_custom_call.1} parent=11 // pred_check
          %p99 = pneg %p58
        $region14: #{tpu_custom_call.1} parent=11 // pred_check_branch
          %101 = sbr.rel (%p99) target = $region16
        $region15: #{tpu_custom_call.1} parent=11 // pred_region
          _
        $region16: #{tpu_custom_call.1} parent=11 // pred_fallthru
          _
      $region12: #{tpu_custom_call.1} parent=5 // pred_fallthru
        _
      %p102 = scmp.lt.s32.totalorder %s11, 2
      // Predicated region
      $region17: #{tpu_custom_call.1} parent=5 // pred_check
        %p103 = pneg %p102
      $region18: #{tpu_custom_call.1} parent=5 // pred_check_branch
        %105 = sbr.rel (%p103) target = $region20
      $region19: #{tpu_custom_call.1} parent=5 // pred_region
        // Predicated region
        $region21: #{tpu_custom_call.1} parent=19 // pred_check
          %p106 = pneg %p31
        $region22: #{tpu_custom_call.1} parent=19 // pred_check_branch
          %108 = sbr.rel (%p106) target = $region24
        $region23: #{tpu_custom_call.1} parent=19 // pred_region
          %s109 = smul.u32 16, %s11
          %p110 = scmp.lt.s32.totalorder %s109, 31
          %s111 = scalar_select %p110, %s109, 31
          %s112 = smul.addr %s111, 4
          %s113 = scalar_lea.vmem %s0, %s112
          %s114 = smul.u32 16, %s11
        $region24: #{tpu_custom_call.1} parent=19 // pred_fallthru
          _
      $region20: #{tpu_custom_call.1} parent=5 // pred_fallthru
        _
      %p115 = scmp.le.s32.totalorder 1, %s11
      %p116 = scmp.lt.s32.totalorder %s11, 3
      %p117 = pnand %p115, %p116
      %p118 = pneg %p117
      // Predicated region
      $region25: #{tpu_custom_call.1} parent=5 // pred_check
        _
      $region26: #{tpu_custom_call.1} parent=5 // pred_check_branch
        %120 = sbr.rel (%p117) target = $region28
      $region27: #{tpu_custom_call.1} parent=5 // pred_region
        %s121 = ssub.s32 %s11, 1
        %s122 = smul.u32 16, %s16
        %p123 = scmp.lt.s32.totalorder %s122, 31
        %s124 = scalar_select %p123, %s122, 31
        %s125 = smul.addr %s124, 4
        %s126 = scalar_lea.vmem %s0, %s125
        %p127 = pneg %p37
        %p128 = pneg %p34
        %p129 = pneg %p58
        %p130 = pneg %p55
        %p131 = pneg %p84
        %p132 = pneg %p81
        %s133 = sand.u32 %s71, 1
        %s134 = scalar_lea.sflag [#allocation3], %s133
        %s135 = sand.u32 %s71, 1
        %s136 = smul.addr %s135, 64
        %s137 = scalar_lea.vmem [#allocation2], %s136
        %s138 = smul.u32 16, %s16
        %p139 = scmp.lt.s32.totalorder %s138, 31
        %s140 = scalar_select %p139, %s138, 31
        %s141 = smul.addr %s140, 4
        %s142 = scalar_lea.vmem %s0, %s141
        %s143 = smul.u32 16, %s16
        %s144 = smul.u32 16, %s16
        %v146 = vld [vmem:[%s142] sm:$0xf]
        %v147 = vld [vmem:[%s142 + $0x4] sm:$0xf]
        %v148 = vld [vmem:[%s142 + $0x8] sm:$0xf]
        %v149 = vld [vmem:[%s142 + $0xc] sm:$0xf]
        %v150 = vld [vmem:[%s142 + $0x10] sm:$0xf]
        %v151 = vld [vmem:[%s142 + $0x14] sm:$0xf]
        %v152 = vld [vmem:[%s142 + $0x18] sm:$0xf]
        %v153 = vld [vmem:[%s142 + $0x1c] sm:$0xf]
        %v154 = vld [vmem:[%s142 + $0x20] sm:$0xf]
        %v155 = vld [vmem:[%s142 + $0x24] sm:$0xf]
        %v156 = vld [vmem:[%s142 + $0x28] sm:$0xf]
        %v157 = vld [vmem:[%s142 + $0x2c] sm:$0xf]
        %v158 = vld [vmem:[%s142 + $0x30] sm:$0xf]
        %v159 = vld [vmem:[%s142 + $0x34] sm:$0xf]
        %v160 = vld [vmem:[%s142 + $0x38] sm:$0xf]
        %v161 = vld [vmem:[%s142 + $0x3c] sm:$0xf]
        %v162 = vld [vmem:[%s1] sm:$0xf]
        %v163 = vld [vmem:[%s1 + $0x4] sm:$0xf]
        %v164 = vld [vmem:[%s1 + $0x8] sm:$0xf]
        %v165 = vld [vmem:[%s1 + $0xc] sm:$0xf]
        %v166 = vld [vmem:[%s1 + $0x10] sm:$0xf]
        %v167 = vld [vmem:[%s1 + $0x14] sm:$0xf]
        %v168 = vld [vmem:[%s1 + $0x18] sm:$0xf]
        %v169 = vld [vmem:[%s1 + $0x1c] sm:$0xf]
        %v186 = vunpack.c.l.b16 %v146
        %v187 = vunpack.c.l.b16 %v147
        %v188 = vunpack.c.l.b16 %v148
        %v189 = vunpack.c.l.b16 %v149
        %v190 = vunpack.c.l.b16 %v150
        %v191 = vunpack.c.l.b16 %v151
        %v192 = vunpack.c.l.b16 %v152
        %v193 = vunpack.c.l.b16 %v153
        %v194 = vunpack.c.l.b16 %v154
        %v195 = vunpack.c.l.b16 %v155
        %v196 = vunpack.c.l.b16 %v156
        %v197 = vunpack.c.l.b16 %v157
        %v198 = vunpack.c.l.b16 %v158
        %v199 = vunpack.c.l.b16 %v159
        %v200 = vunpack.c.l.b16 %v160
        %v201 = vunpack.c.l.b16 %v161
        %v202 = vpack.c.b16 %v187, %v186
        %v203 = vpack.c.b16 %v189, %v188
        %v204 = vpack.c.b16 %v191, %v190
        %v205 = vpack.c.b16 %v193, %v192
        %v206 = vpack.c.b16 %v195, %v194
        %v207 = vpack.c.b16 %v197, %v196
        %v208 = vpack.c.b16 %v199, %v198
        %v209 = vpack.c.b16 %v201, %v200
        %v218 = vunpack.c.l.b16 %v162
        %v219 = vunpack.c.l.b16 %v163
        %v220 = vunpack.c.l.b16 %v164
        %v221 = vunpack.c.l.b16 %v165
        %v222 = vunpack.c.l.b16 %v166
        %v223 = vunpack.c.l.b16 %v167
        %v224 = vunpack.c.l.b16 %v168
        %v225 = vunpack.c.l.b16 %v169
        %v226 = vpack.c.b16 %v219, %v218
        %v227 = vpack.c.b16 %v221, %v220
        %v228 = vpack.c.b16 %v223, %v222
        %v229 = vpack.c.b16 %v225, %v224
        %vm234 = vcmask 523264
        %v236 = vsel %vm234, %v202, 0
        %v239 = vsel %vm234, %v203, 0
        %v242 = vsel %vm234, %v204, 0
        %v245 = vsel %vm234, %v205, 0
        %v248 = vsel %vm234, %v206, 0
        %v251 = vsel %vm234, %v207, 0
        %v254 = vsel %vm234, %v208, 0
        %v257 = vsel %vm234, %v209, 0
        %259 = vmatprep.subr.bf16.mxu0 0
        %260 = vmatpush1.bf16.msra.mxu0 %v226
        %261 = vmatprep.subr.bf16.mxu0 0
        %262 = vmatpush1.bf16.msra.mxu0 %v227
        %263 = vmatprep.subr.bf16.mxu0 0
        %264 = vmatpush1.bf16.msra.mxu0 %v228
        %265 = vmatprep.subr.bf16.mxu0 0
        %266 = vmatpush1.bf16.msra.mxu0 %v229
        %267 = vmatprep.subr.bf16.mxu0 0
        %268 = vmatpush1.bf16.msra.mxu0 0
        %269 = vmatprep.subr.bf16.mxu0 0
        %270 = vmatpush1.bf16.msra.mxu0 0
        %271 = vmatprep.subr.bf16.mxu0 0
        %272 = vmatpush1.bf16.msra.mxu0 0
        %273 = vmatprep.subr.bf16.mxu0 0
        %274 = vmatpush1.bf16.msra.mxu0 0
        %275 = vmatprep.subr.bf16.mxu0 0
        %276 = vmatpush1.bf16.msra.mxu0 0
        %277 = vmatprep.subr.bf16.mxu0 0
        %278 = vmatpush1.bf16.msra.mxu0 0
        %279 = vmatprep.subr.bf16.mxu0 0
        %280 = vmatpush1.bf16.msra.mxu0 0
        %281 = vmatprep.subr.bf16.mxu0 0
        %282 = vmatpush1.bf16.msra.mxu0 0
        %283 = vmatprep.subr.bf16.mxu0 0
        %284 = vmatpush1.bf16.msra.mxu0 0
        %285 = vmatprep.subr.bf16.mxu0 0
        %286 = vmatpush1.bf16.msra.mxu0 0
        %287 = vmatprep.subr.bf16.mxu0 0
        %288 = vmatpush1.bf16.msra.mxu0 0
        %289 = vmatprep.subr.bf16.mxu0 0
        %290 = vmatpush1.bf16.msra.mxu0 0
        %291 = vmatprep.mubr.bf16.mxu0 0
        %292 = vmatmul.mubr.bf16.gmra.mrb[0].mxu0 %v236
        %v293 = vpop.f32.mrb[0].mxu0
        %v294 = vadd.f32 0.0, %v293
        %v295 = vpop.f32.mrb[0].mxu0
        %v296 = vpop.f32.mrb[0].mxu0
        %v297 = vadd.f32 0.0, %v296
        %v298 = vpop.f32.mrb[0].mxu0
        %299 = vmatprep.mubr.bf16.mxu0 0
        %300 = vmatmul.mubr.bf16.gmra.mrb[0].mxu0 %v239
        %v301 = vpop.f32.mrb[0].mxu0
        %v302 = vadd.f32 0.0, %v301
        %v303 = vpop.f32.mrb[0].mxu0
        %v304 = vpop.f32.mrb[0].mxu0
        %v305 = vadd.f32 0.0, %v304
        %v306 = vpop.f32.mrb[0].mxu0
        %307 = vmatprep.mubr.bf16.mxu0 0
        %308 = vmatmul.mubr.bf16.gmra.mrb[0].mxu0 %v242
        %v309 = vpop.f32.mrb[0].mxu0
        %v310 = vadd.f32 0.0, %v309
        %v311 = vpop.f32.mrb[0].mxu0
        %v312 = vpop.f32.mrb[0].mxu0
        %v313 = vadd.f32 0.0, %v312
        %v314 = vpop.f32.mrb[0].mxu0
        %315 = vmatprep.mubr.bf16.mxu0 0
        %316 = vmatmul.mubr.bf16.gmra.mrb[0].mxu0 %v245
        %v317 = vpop.f32.mrb[0].mxu0
        %v318 = vadd.f32 0.0, %v317
        %v319 = vpop.f32.mrb[0].mxu0
        %v320 = vpop.f32.mrb[0].mxu0
        %v321 = vadd.f32 0.0, %v320
        %v322 = vpop.f32.mrb[0].mxu0
        %323 = vmatprep.mubr.bf16.mxu0 0
        %324 = vmatmul.mubr.bf16.gmra.mrb[0].mxu0 %v248
        %v325 = vpop.f32.mrb[0].mxu0
        %v326 = vadd.f32 0.0, %v325
        %v327 = vpop.f32.mrb[0].mxu0
        %v328 = vpop.f32.mrb[0].mxu0
        %v329 = vadd.f32 0.0, %v328
        %v330 = vpop.f32.mrb[0].mxu0
        %331 = vmatprep.mubr.bf16.mxu0 0
        %332 = vmatmul.mubr.bf16.gmra.mrb[0].mxu0 %v251
        %v333 = vpop.f32.mrb[0].mxu0
        %v334 = vadd.f32 0.0, %v333
        %v335 = vpop.f32.mrb[0].mxu0
        %v336 = vpop.f32.mrb[0].mxu0
        %v337 = vadd.f32 0.0, %v336
        %v338 = vpop.f32.mrb[0].mxu0
        %339 = vmatprep.mubr.bf16.mxu0 0
        %340 = vmatmul.mubr.bf16.gmra.mrb[0].mxu0 %v254
        %v341 = vpop.f32.mrb[0].mxu0
        %v342 = vadd.f32 0.0, %v341
        %v343 = vpop.f32.mrb[0].mxu0
        %v344 = vpop.f32.mrb[0].mxu0
        %v345 = vadd.f32 0.0, %v344
        %v346 = vpop.f32.mrb[0].mxu0
        %347 = vmatprep.mubr.bf16.mxu0 0
        %348 = vmatmul.mubr.bf16.gmra.mrb[0].mxu0 %v257
        %v349 = vpop.f32.mrb[0].mxu0
        %v350 = vadd.f32 0.0, %v349
        %v351 = vpop.f32.mrb[0].mxu0
        %v352 = vpop.f32.mrb[0].mxu0
        %v353 = vadd.f32 0.0, %v352
        %v354 = vpop.f32.mrb[0].mxu0
        %355 = vdwg.mxu0
        %v356 = vpack.c.bf16 %v297, %v294
        %v357 = vpack.c.bf16 %v305, %v302
        %v358 = vpack.c.bf16 %v313, %v310
        %v359 = vpack.c.bf16 %v321, %v318
        %v360 = vpack.c.bf16 %v329, %v326
        %v361 = vpack.c.bf16 %v337, %v334
        %v362 = vpack.c.bf16 %v345, %v342
        %v363 = vpack.c.bf16 %v353, %v350
        %v372 = vunpack.c.l.b16 %v356
        %v373 = vunpack.c.h.b16 %v356
        %v374 = vunpack.c.l.b16 %v357
        %v375 = vunpack.c.h.b16 %v357
        %v376 = vunpack.c.l.b16 %v358
        %v377 = vunpack.c.h.b16 %v358
        %v378 = vunpack.c.l.b16 %v359
        %v379 = vunpack.c.h.b16 %v359
        %v380 = vunpack.c.l.b16 %v360
        %v381 = vunpack.c.h.b16 %v360
        %v382 = vunpack.c.l.b16 %v361
        %v383 = vunpack.c.h.b16 %v361
        %v384 = vunpack.c.l.b16 %v362
        %v385 = vunpack.c.h.b16 %v362
        %v386 = vunpack.c.l.b16 %v363
        %v387 = vunpack.c.h.b16 %v363
        %v388 = vpack.c.b16 %v372, %v372
        %v389 = vpack.c.b16 %v373, %v373
        %v390 = vpack.c.b16 %v374, %v374
        %v391 = vpack.c.b16 %v375, %v375
        %v392 = vpack.c.b16 %v376, %v376
        %v393 = vpack.c.b16 %v377, %v377
        %v394 = vpack.c.b16 %v378, %v378
        %v395 = vpack.c.b16 %v379, %v379
        %v396 = vpack.c.b16 %v380, %v380
        %v397 = vpack.c.b16 %v381, %v381
        %v398 = vpack.c.b16 %v382, %v382
        %v399 = vpack.c.b16 %v383, %v383
        %v400 = vpack.c.b16 %v384, %v384
        %v401 = vpack.c.b16 %v385, %v385
        %v402 = vpack.c.b16 %v386, %v386
        %v403 = vpack.c.b16 %v387, %v387
        %420 = vst [vmem:[%s137] sm:$0xf] %v388
        %421 = vst [vmem:[%s137 + $0x4] sm:$0xf] %v389
        %422 = vst [vmem:[%s137 + $0x8] sm:$0xf] %v390
        %423 = vst [vmem:[%s137 + $0xc] sm:$0xf] %v391
        %424 = vst [vmem:[%s137 + $0x10] sm:$0xf] %v392
        %425 = vst [vmem:[%s137 + $0x14] sm:$0xf] %v393
        %426 = vst [vmem:[%s137 + $0x18] sm:$0xf] %v394
        %427 = vst [vmem:[%s137 + $0x1c] sm:$0xf] %v395
        %428 = vst [vmem:[%s137 + $0x20] sm:$0xf] %v396
        %429 = vst [vmem:[%s137 + $0x24] sm:$0xf] %v397
        %430 = vst [vmem:[%s137 + $0x28] sm:$0xf] %v398
        %431 = vst [vmem:[%s137 + $0x2c] sm:$0xf] %v399
        %432 = vst [vmem:[%s137 + $0x30] sm:$0xf] %v400
        %433 = vst [vmem:[%s137 + $0x34] sm:$0xf] %v401
        %434 = vst [vmem:[%s137 + $0x38] sm:$0xf] %v402
        %435 = vst [vmem:[%s137 + $0x3c] sm:$0xf] %v403
        %s436 = sand.u32 %s71, 1
        %s437 = scalar_lea.sflag [#allocation3], %s436
        %s438 = sand.u32 %s71, 1
        %s439 = smul.addr %s438, 64
        %s440 = scalar_lea.vmem [#allocation2], %s439
        // Predicated region
        $region29: #{tpu_custom_call.1} parent=27 // pred_check
          %p441 = pneg %p81
        $region30: #{tpu_custom_call.1} parent=27 // pred_check_branch
          %443 = sbr.rel (%p441) target = $region32
        $region31: #{tpu_custom_call.1} parent=27 // pred_region
          %s444 = smul.u32 16, %s16
          %s446 = ssub.s32 1024, 1024
          %447 = vsyncadd %s437, %s446
          %s448 = smul.addr %s444, 64
          %s449 = scalar_lea.hbm %s2, %s448
          %s450 = sshll.u32 %s440, 4
          %s451 = int_to_ptr.vmem [resolvable:$true] %s450
          %456 = dma.vmem_to_hbm [thread:$0]  %s451, 1024, %s449, %s437, 64, 64, 4
        $region32: #{tpu_custom_call.1} parent=27 // pred_fallthru
          _
      $region28: #{tpu_custom_call.1} parent=5 // pred_fallthru
        _
      %p457 = scmp.le.s32.totalorder 2, %s11
      // Predicated region
      $region33: #{tpu_custom_call.1} parent=5 // pred_check
        %p458 = pneg %p457
      $region34: #{tpu_custom_call.1} parent=5 // pred_check_branch
        %460 = sbr.rel (%p458) target = $region36
      $region35: #{tpu_custom_call.1} parent=5 // pred_region
        %s461 = ssub.s32 %s11, 2
        // Predicated region
        $region37: #{tpu_custom_call.1} parent=35 // pred_check
          %p462 = pneg %p87
        $region38: #{tpu_custom_call.1} parent=35 // pred_check_branch
          %464 = sbr.rel (%p462) target = $region40
        $region39: #{tpu_custom_call.1} parent=35 // pred_region
          %s465 = sand.u32 %s72, 1
          %s466 = scalar_lea.sflag [#allocation3], %s465
          %s467 = sand.u32 %s72, 1
          %s468 = smul.addr %s467, 64
          %s469 = scalar_lea.vmem [#allocation2], %s468
          %470 = dma.done %s466, 1024
        $region40: #{tpu_custom_call.1} parent=35 // pred_fallthru
          _
      $region36: #{tpu_custom_call.1} parent=5 // pred_fallthru
        _
    $region6: #{tpu_custom_call.1} parent=1 // loop_footer
      %s15 = sadd.s32 1, %s11
    $region7: #{tpu_custom_call.1} parent=1 // loop_footer_branch
      %10 = sbr.rel target = $region3
    $region8: #{tpu_custom_call.1} parent=1 // loop_exit
      _
    %471 = vsyncpa [#allocation3], 1
    %s472 = scalar_lea.sflag [#allocation3], 1
    %473 = vsyncpa %s472, 1

</llo_original>
